<compile_context>
chip_gen: v7x
topology: tpu7x:2x2x1
jax: 0.10.0
libtpu: 0.0.40
codegen_flags: <defaults>
</compile_context>

<pallas_src>
import math
from typing import NamedTuple, Optional

import jax
import jax.numpy as jnp
from jax.experimental import pallas as pl
from jax.experimental.pallas import tpu as pltpu


# ------------------------- chip-dependent defaults ---------------------------

def _vmem_capacity_bytes() -> int:
    try:
        info = pltpu.get_tpu_info()
        cap = getattr(info, "vmem_capacity_bytes", None)
        if cap:
            return int(cap)
    except Exception:
        pass
    return 128 << 20  # v5e / v6e default


_VMEM_BYTES = _vmem_capacity_bytes()
if _VMEM_BYTES <= (64 << 20):
    # v7x-class part (64 MiB VMEM / TC): moderate tiles, leave Mosaic headroom.
    _TM_MAX, _TN_MAX, _TK_MAX = 256, 512, 512
    _VMEM_CAP = (_VMEM_BYTES * 3) // 4
else:
    # v5e / v6e (128 MiB VMEM): big tiles amortize the ~0.35us per-step overhead
    # and cut redundant HBM re-reads of x / w.
    _TM_MAX, _TN_MAX, _TK_MAX = 512, 1024, 1024
    _VMEM_CAP = 96 << 20


def _round_up(v: int, m: int) -> int:
    return ((v + m - 1) // m) * m


def _sublane_multiple(dtype) -> int:
    # Sub-32-bit dtypes pack along sublanes: 16 rows per bf16 vreg, 32 per int8.
    return {4: 8, 2: 16, 1: 32}.get(jnp.dtype(dtype).itemsize, 8)


# ----------------------------- Pallas kernels --------------------------------

def _linear_kernel(x_ref, w_ref, b_ref, o_ref, acc_ref):
    # x_ref: (tm, tk)  w_ref: (tk, tn)  b_ref: (1, tn)
    # o_ref: (tm, tn)  acc_ref: (tm, tn) f32 scratch, resident across K steps.
    k = pl.program_id(2)
    prod = jnp.dot(x_ref[...], w_ref[...], preferred_element_type=jnp.float32)

    @pl.when(k == 0)
    def _():
        # First K step: write dot + bias directly (no zero-fill / RMW).
        acc_ref[...] = prod + b_ref[...].astype(jnp.float32)

    @pl.when(k > 0)
    def _():
        acc_ref[...] += prod

    @pl.when(k == pl.num_programs(2) - 1)
    def _():
        o_ref[...] = acc_ref[...].astype(o_ref.dtype)


def _linear_kernel_single_k(x_ref, w_ref, b_ref, o_ref):
    # Fast path when the whole K dimension fits one tile: no scratch, no pl.when.
    o_ref[...] = (
        jnp.dot(x_ref[...], w_ref[...], preferred_element_type=jnp.float32)
        + b_ref[...].astype(jnp.float32)
    ).astype(o_ref.dtype)


# --------------------- cached weight preparation (one-time) ------------------

class PreparedLinear(NamedTuple):
    w_t: jax.Array      # (Kp, Np) weight pre-transposed to (in, out) and padded
    bias2d: jax.Array   # (1, Np)  padded bias
    in_features: int
    out_features: int
    tn: int
    tk: int


def _prepare_from_wt(w_t, bias, *, tn_max=None, tk_max=None) -> PreparedLinear:
    tn_max = _TN_MAX if tn_max is None else tn_max
    tk_max = _TK_MAX if tk_max is None else tk_max
    in_f, out_f = w_t.shape
    N128 = _round_up(out_f, 128)
    K128 = _round_up(in_f, 128)

    tn = min(tn_max, N128)
    # Guarantee >= 2 N blocks when possible so both v7x TensorCores get work on
    # small-batch (single-M-block) classifier calls; harmless on v5e/v6e.
    if N128 >= 256 and tn == N128:
        tn = _round_up(-(-N128 // 2), 128)
    tk = min(tk_max, K128)

    Np = _round_up(out_f, tn)
    Kp = _round_up(in_f, tk)

    if (Kp, Np) != (in_f, out_f):
        w_t = jnp.pad(w_t, ((0, Kp - in_f), (0, Np - out_f)))
    bias2d = bias.reshape(1, out_f)
    if Np != out_f:
        bias2d = jnp.pad(bias2d, ((0, 0), (0, Np - out_f)))
    return PreparedLinear(w_t, bias2d, in_f, out_f, tn, tk)


def prepare_linear(weight, bias, *, tn_max=None, tk_max=None) -> PreparedLinear:
    """Pre-transpose + pre-pad the (out, in) weight once; cache across forwards."""
    return _prepare_from_wt(weight.T, bias, tn_max=tn_max, tk_max=tk_max)


def prepare_svdrop(weight, bias, *, V=None, mask=None, V_inv=None, mu_R=None,
                   tn_max=None, tk_max=None) -> PreparedLinear:
    """Fold the (optional) singular-drop transform into cached GEMM params.

    weight: (out, in)  bias: (out,)  V: (in, q)  V_inv: (q, in)
    mask: (q,)  mu_R: (in,)
    Recompute only when the mask / V change.
    """
    if V is None:
        return prepare_linear(weight, bias, tn_max=tn_max, tk_max=tk_max)
    # Re-associated transform in f32: new_w_t = V @ (diag(mask) @ (V_inv @ W^T))
    # -> O(q*in*out) flops, no (in, in) intermediate.
    w_t = weight.T.astype(jnp.float32)                               # (in, out)
    t = mask.astype(jnp.float32)[:, None] * (V_inv.astype(jnp.float32) @ w_t)
    new_w_t = V.astype(jnp.float32) @ t                              # (in, out)
    scalar = -(mu_R.astype(jnp.float32)[:, None] * (new_w_t - w_t)).sum()
    new_bias = (scalar + bias.astype(jnp.float32)).astype(bias.dtype)
    return _prepare_from_wt(new_w_t.astype(weight.dtype), new_bias,
                            tn_max=tn_max, tk_max=tk_max)


# --------------------------- pallas_call wrapper ------------------------------

def linear_pallas(x, prep: PreparedLinear, *, tm_max: Optional[int] = None):
    """y = x @ w_t + bias with cached, pre-padded weights.

    x: (B, in_features). Returns (B, out_features) in x.dtype.
    """
    tm_max = _TM_MAX if tm_max is None else tm_max
    B, K = x.shape
    assert K == prep.in_features, (K, prep.in_features)
    Kp, Np = prep.w_t.shape
    tn, tk = prep.tn, prep.tk
    out_dtype = x.dtype

    tm = min(tm_max, _round_up(B, _sublane_multiple(x.dtype)))
    Mp = _round_up(B, tm)
    if (Mp, Kp) != (B, K):
        # Zero-pad: padded K columns contribute nothing to the dot.
        x = jnp.pad(x, ((0, Mp - B), (0, Kp - K)))

    m_blocks, n_blocks, k_blocks = Mp // tm, Np // tn, Kp // tk

    isz = lambda a: jnp.dtype(a.dtype).itemsize
    tile_bytes = (tm * tk * isz(x) + tk * tn * isz(prep.w_t)
                  + tn * isz(prep.bias2d) + tm * tn * jnp.dtype(out_dtype).itemsize)
    vmem_est = 2 * tile_bytes + tm * tn * 4           # double-buffered tiles + f32 acc
    vmem_limit = int(min(max(int(1.5 * vmem_est), 16 << 20), _VMEM_CAP))

    cost = pl.CostEstimate(
        flops=2 * Mp * Np * Kp,
        transcendentals=0,
        bytes_accessed=(Mp * Kp * isz(x) + Kp * Np * isz(prep.w_t)
                        + Np * isz(prep.bias2d)
                        + Mp * Np * jnp.dtype(out_dtype).itemsize),
    )

    if k_blocks == 1:
        out = pl.pallas_call(
            _linear_kernel_single_k,
            out_shape=jax.ShapeDtypeStruct((Mp, Np), out_dtype),
            grid_spec=pltpu.PrefetchScalarGridSpec(
                num_scalar_prefetch=0,
                grid=(m_blocks, n_blocks),
                in_specs=[
                    pl.BlockSpec((tm, tk), lambda i, j: (i, 0)),
                    pl.BlockSpec((tk, tn), lambda i, j: (0, j)),
                    pl.BlockSpec((1, tn), lambda i, j: (0, j)),
                ],
                out_specs=pl.BlockSpec((tm, tn), lambda i, j: (i, j)),
            ),
            compiler_params=pltpu.CompilerParams(
                dimension_semantics=("parallel", "parallel"),
                vmem_limit_bytes=vmem_limit,
            ),
            cost_estimate=cost,
        )(x, prep.w_t, prep.bias2d)
    else:
        out = pl.pallas_call(
            _linear_kernel,
            out_shape=jax.ShapeDtypeStruct((Mp, Np), out_dtype),
            grid_spec=pltpu.PrefetchScalarGridSpec(
                num_scalar_prefetch=0,
                grid=(m_blocks, n_blocks, k_blocks),
                in_specs=[
                    pl.BlockSpec((tm, tk), lambda i, j, k: (i, k)),
                    pl.BlockSpec((tk, tn), lambda i, j, k: (k, j)),
                    pl.BlockSpec((1, tn), lambda i, j, k: (0, j)),
                ],
                out_specs=pl.BlockSpec((tm, tn), lambda i, j, k: (i, j)),
                scratch_shapes=[pltpu.VMEM((tm, tn), jnp.float32)],
            ),
            compiler_params=pltpu.CompilerParams(
                dimension_semantics=("parallel", "parallel", "arbitrary"),
                vmem_limit_bytes=vmem_limit,
            ),
            cost_estimate=cost,
        )(x, prep.w_t, prep.bias2d)

    if (Mp, Np) != (B, prep.out_features):
        out = out[:B, :prep.out_features]
    return out


def svdrop_classifier_forward(x, prep: PreparedLinear, *, tm_max=None):
    """Forward pass of SVDropClassifier given cached/prepared GEMM params."""
    return linear_pallas(x, prep, tm_max=tm_max)


# --------------------------- Deterministic init ------------------------------

def init_params(key, in_features, out_features, dtype=jnp.float32):
    # kaiming_uniform_(a=sqrt(5)) on (out,in) -> bound = 1/sqrt(fan_in); same for bias.
    kw, kb = jax.random.split(key)
    bound = 1.0 / math.sqrt(in_features)
    weight = jax.random.uniform(kw, (out_features, in_features), dtype, -bound, bound)
    bias = jax.random.uniform(kb, (out_features,), dtype, -bound, bound)
    return weight, bias


# ----------------------------------- main ------------------------------------

if __name__ == "__main__":
    key = jax.random.PRNGKey(0)
    k_x, k_p, k_v, k_r, k_x2, k_p2, k_x3, k_p3 = jax.random.split(key, 8)

    # --- Test 1: toy shapes, both module states (single-K fast path) ---
    batch, in_features, out_features, n_dirs = 8, 32, 16, 8
    x = jax.random.normal(k_x, (batch, in_features), jnp.float32)
    weight, bias = init_params(k_p, in_features, out_features)

    # Default state (V is None) -> plain linear. Prepare once, reuse per call.
    prep_default = prepare_svdrop(weight, bias)
    out_default = jax.block_until_ready(svdrop_classifier_forward(x, prep_default))
    ref_default = x @ weight.T + bias
    assert jnp.allclose(out_default, ref_default, atol=1e-5, rtol=1e-5)
    # Second call reuses the cached prepared weights (no transpose/pad copies).
    out_default2 = jax.block_until_ready(svdrop_classifier_forward(x, prep_default))
    assert jnp.allclose(out_default2, ref_default, atol=1e-5, rtol=1e-5)

    # Singular-drop state (V set, one direction dropped: dropout_dim([3]))
    V = jax.random.normal(k_v, (in_features, n_dirs), jnp.float32)
    V_inv = jnp.linalg.pinv(V)                                # (n_dirs, in)
    mu_R = jax.random.normal(k_r, (in_features,), jnp.float32)
    mask = jnp.ones((n_dirs,), jnp.float32).at[3].set(0.0)

    prep_drop = prepare_svdrop(weight, bias, V=V, mask=mask, V_inv=V_inv, mu_R=mu_R)
    out_drop = jax.block_until_ready(svdrop_classifier_forward(x, prep_drop))
    new_w_ref = (V @ jnp.diag(mask) @ V_inv @ weight.T).T
    new_b_ref = (-mu_R * (new_w_ref - weight)).sum() + bias
    ref_drop = x @ new_w_ref.T + new_b_ref
    assert jnp.allclose(out_drop, ref_drop, atol=1e-3, rtol=1e-3)

    # --- Test 2: multi-K-step accumulator grid + >=2 N blocks ---
    B2, K2, N2 = 16, 640, 256
    x2 = jax.random.normal(k_x2, (B2, K2), jnp.float32)
    w2, b2 = init_params(k_p2, K2, N2)
    prep2 = prepare_svdrop(w2, b2, tk_max=512)   # Kp=1024 -> 2 K steps, 2 N blocks
    out2 = jax.block_until_ready(svdrop_classifier_forward(x2, prep2))
    ref2 = x2 @ w2.T + b2
    assert jnp.allclose(out2, ref2, atol=1e-4, rtol=1e-4)

    # --- Test 3: bf16 weights/activations (dtype-aware sublane tiling) ---
    B3, K3, N3 = 8, 256, 128
    x3 = jax.random.normal(k_x3, (B3, K3), jnp.float32).astype(jnp.bfloat16)
    w3, b3 = init_params(k_p3, K3, N3)
    w3, b3 = w3.astype(jnp.bfloat16), b3.astype(jnp.bfloat16)
    prep3 = prepare_svdrop(w3, b3)
    out3 = jax.block_until_ready(svdrop_classifier_forward(x3, prep3))
    ref3 = (x3.astype(jnp.float32) @ w3.T.astype(jnp.float32)
            + b3.astype(jnp.float32))
    assert jnp.allclose(out3.astype(jnp.float32), ref3, atol=5e-2, rtol=5e-2)

    print("KERNEL_OK")
</pallas_src>

<mosaic_0001>
module attributes {stable_mosaic.version = 11 : i64} {
  func.func @_linear_kernel_single_k(%arg0: i32, %arg1: i32, %arg2: memref<8x128xf32, #tpu.memory_space<vmem>>, %arg3: memref<128x128xf32, #tpu.memory_space<vmem>>, %arg4: memref<1x128xf32, #tpu.memory_space<vmem>>, %arg5: memref<8x128xf32, #tpu.memory_space<vmem>>) attributes {dimension_semantics = [#tpu.dimension_semantics<parallel>, #tpu.dimension_semantics<parallel>], iteration_bounds = array<i64: 1, 1>, scalar_prefetch = 0 : i64, scratch_operands = 0 : i64, tpu.core_type = #tpu.core_type<tc>, window_params = [{transform_indices = @transform_0, window_bounds = array<i64: 8, 128>}, {transform_indices = @transform_1, window_bounds = array<i64: 128, 128>}, {transform_indices = @transform_2, window_bounds = array<i64: 1, 128>}, {transform_indices = @transform_3, window_bounds = array<i64: 8, 128>}]} {
    %c0 = arith.constant 0 : index
    %c0_0 = arith.constant 0 : index
    %0 = vector.load %arg2[%c0, %c0_0] : memref<8x128xf32, #tpu.memory_space<vmem>>, vector<8x128xf32>
    %c0_1 = arith.constant 0 : index
    %c0_2 = arith.constant 0 : index
    %1 = vector.load %arg3[%c0_1, %c0_2] : memref<128x128xf32, #tpu.memory_space<vmem>>, vector<128x128xf32>
    %cst = arith.constant dense<0.000000e+00> : vector<8x128xf32>
    %2 = tpu.matmul %0, %1, %cst {dimension_numbers = #tpu.dot_dimension_numbers<[1], [0], [0], [1], [0, 0, 1, 1], [], []>} : vector<8x128xf32>, vector<128x128xf32>, vector<8x128xf32> -> vector<8x128xf32>
    %c0_3 = arith.constant 0 : index
    %c0_4 = arith.constant 0 : index
    %3 = vector.load %arg4[%c0_3, %c0_4] : memref<1x128xf32, #tpu.memory_space<vmem>>, vector<1x128xf32>
    %4 = vector.broadcast %3 : vector<1x128xf32> to vector<8x128xf32>
    %5 = arith.addf %2, %4 : vector<8x128xf32>
    %c0_5 = arith.constant 0 : index
    %c0_6 = arith.constant 0 : index
    %6 = vector.load %arg5[%c0_5, %c0_6] : memref<8x128xf32, #tpu.memory_space<vmem>>, vector<8x128xf32>
    tpu.vector_store %arg5[%c0_5, %c0_6], %5 {strides = array<i32>} : memref<8x128xf32, #tpu.memory_space<vmem>>, vector<8x128xf32>,
    return
  }
  func.func @transform_0(%arg0: i32, %arg1: i32) -> (i32, i32) {
    %c0_i32 = arith.constant 0 : i32
    %c0_i32_0 = arith.constant 0 : i32
    return %arg0, %c0_i32 : i32, i32
  }
  func.func @transform_1(%arg0: i32, %arg1: i32) -> (i32, i32) {
    %c0_i32 = arith.constant 0 : i32
    %c0_i32_0 = arith.constant 0 : i32
    return %c0_i32, %arg1 : i32, i32
  }
  func.func @transform_2(%arg0: i32, %arg1: i32) -> (i32, i32) {
    %c0_i32 = arith.constant 0 : i32
    %c0_i32_0 = arith.constant 0 : i32
    return %c0_i32, %arg1 : i32, i32
  }
  func.func @transform_3(%arg0: i32, %arg1: i32) -> (i32, i32) {
    %c0_i32 = arith.constant 0 : i32
    return %arg0, %arg1 : i32, i32
  }
}

</mosaic_0001>

<llo_original>
// kernel: tpu_custom_call.1
$region0: #{tpu_custom_call.1}
  #allocation0 [shape = 'u32[]', space=smem, size = 0x4, offset = 0x4, fixed_abs, tag = 'smem constant byte address 0x4 - core index']
  #allocation1 [shape = 'u32[144,128]{1,0:T(1,128)}', space=vmem, size = 0x12000, scoped, tag = 'internal scratch']
  %s0 = inlined_call_operand.hbm [shape: f32[8,128], index: 0, kind: input, shape index: {}]
  %s1 = inlined_call_operand.hbm [shape: f32[128,128], index: 1, kind: input, shape index: {}]
  %s2 = inlined_call_operand.vmem [shape: f32[1,128], index: 2, kind: input, shape index: {}]
  %s3 = inlined_call_operand.hbm [shape: f32[8,128], index: 3, kind: output, shape index: {}]
  %s4 = sld [smem:[#allocation0]]
  $region30: #{tpu_custom_call.1} parent=0
    _
  %s6 = ssub.s32 1, %s4
  %s7 = scalar_select 0, %s6, %s4
  $region1: #{tpu_custom_call.1} parent=0
    #allocation2 [shape = 'u8[4096]{0}', space=vmem, size = 0x1000, scoped, tag = 'input window, operand 0, single buffered']
    #allocation3 [shape = 's32[1]{0}', space=sflag, size = 0x4, scoped, tag = 'scoped memory for tpu_custom_call.1']
    #allocation4 [shape = 's32[1]{0}', space=sflag, size = 0x4, scoped, tag = 'scoped memory for tpu_custom_call.1']
    #allocation5 [shape = 'u8[65536]{0}', space=vmem, size = 0x10000, scoped, tag = 'input window, operand 1, single buffered']
    #allocation6 [shape = 's32[1]{0}', space=sflag, size = 0x4, scoped, tag = 'scoped memory for tpu_custom_call.1']
    #allocation7 [shape = 'u8[4096]{0}', space=vmem, size = 0x1000, scoped, tag = 'output window, operand 0, single buffered']
    %8 = vsyncpa [#allocation3], 0
    %9 = vsyncpa [#allocation6], 0
    %10 = vsyncpa [#allocation4], 0
    // Predicated region
    $region2: #{tpu_custom_call.1} parent=1 // pred_check
      _
    $region3: #{tpu_custom_call.1} parent=1 // pred_check_branch
      %12 = sbr.rel (0) target = $region5
    $region4: #{tpu_custom_call.1} parent=1 // pred_region
      %s14 = ssub.s32 128, 128
      %15 = vsyncadd [#allocation3], %s14
      %s17 = sshll.u32 [#allocation2], 4
      %s18 = int_to_ptr.vmem [resolvable:$true] %s17
      %20 = dma.hbm_to_vmem [thread:$0]  %s0, 128, %s18, [#allocation3]
    $region5: #{tpu_custom_call.1} parent=1 // pred_fallthru
      _
    // Predicated region
    $region6: #{tpu_custom_call.1} parent=1 // pred_check
      _
    $region7: #{tpu_custom_call.1} parent=1 // pred_check_branch
      %22 = sbr.rel (0) target = $region9
    $region8: #{tpu_custom_call.1} parent=1 // pred_region
      %s24 = ssub.s32 2048, 2048
      %25 = vsyncadd [#allocation6], %s24
      %s26 = sshll.u32 [#allocation5], 4
      %s27 = int_to_ptr.vmem [resolvable:$true] %s26
      %32 = dma.hbm_to_vmem [thread:$0]  %s1, 2048, %s27, [#allocation6], 128, 128, 8
    $region9: #{tpu_custom_call.1} parent=1 // pred_fallthru
      _
    // Predicated region
    $region10: #{tpu_custom_call.1} parent=1 // pred_check
      _
    $region11: #{tpu_custom_call.1} parent=1 // pred_check_branch
      %34 = sbr.rel (0) target = $region13
    $region12: #{tpu_custom_call.1} parent=1 // pred_region
      _
    $region13: #{tpu_custom_call.1} parent=1 // pred_fallthru
      _
    // Predicated region
    $region14: #{tpu_custom_call.1} parent=1 // pred_check
      _
    $region15: #{tpu_custom_call.1} parent=1 // pred_check_branch
      %36 = sbr.rel (0) target = $region17
    $region16: #{tpu_custom_call.1} parent=1 // pred_region
      %37 = dma.done [#allocation3], 128
    $region17: #{tpu_custom_call.1} parent=1 // pred_fallthru
      _
    // Predicated region
    $region18: #{tpu_custom_call.1} parent=1 // pred_check
      _
    $region19: #{tpu_custom_call.1} parent=1 // pred_check_branch
      %39 = sbr.rel (0) target = $region21
    $region20: #{tpu_custom_call.1} parent=1 // pred_region
      %40 = dma.done [#allocation6], 2048
    $region21: #{tpu_custom_call.1} parent=1 // pred_fallthru
      _
    %v41 = vld [vmem:[#allocation2] sm:$0xff]
    %v42 = vld [vmem:[#allocation5] sm:$0xff]
    %v43 = vld [vmem:[#allocation5 + $0x8] sm:$0xff]
    %v44 = vld [vmem:[#allocation5 + $0x10] sm:$0xff]
    %v45 = vld [vmem:[#allocation5 + $0x18] sm:$0xff]
    %v46 = vld [vmem:[#allocation5 + $0x20] sm:$0xff]
    %v47 = vld [vmem:[#allocation5 + $0x28] sm:$0xff]
    %v48 = vld [vmem:[#allocation5 + $0x30] sm:$0xff]
    %v49 = vld [vmem:[#allocation5 + $0x38] sm:$0xff]
    %v50 = vld [vmem:[#allocation5 + $0x40] sm:$0xff]
    %v51 = vld [vmem:[#allocation5 + $0x48] sm:$0xff]
    %v52 = vld [vmem:[#allocation5 + $0x50] sm:$0xff]
    %v53 = vld [vmem:[#allocation5 + $0x58] sm:$0xff]
    %v54 = vld [vmem:[#allocation5 + $0x60] sm:$0xff]
    %v55 = vld [vmem:[#allocation5 + $0x68] sm:$0xff]
    %v56 = vld [vmem:[#allocation5 + $0x70] sm:$0xff]
    %v57 = vld [vmem:[#allocation5 + $0x78] sm:$0xff]
    %v58 = vld [vmem:[%s2] sm:$0x1]
    %v60 = vlaneseq
    %v61 = vshrl.u32 %v60, 7
    %v62 = vsub.s32 0, %v61
    %v63 = vrot.slane %v58, %v62
    %65 = vmatprep.subr.mxu0 0.0
    %66 = vmatpush1.msra.mxu0 %v42
    %67 = vmatprep.subr.mxu0 0.0
    %68 = vmatpush1.msra.mxu0 %v43
    %69 = vmatprep.subr.mxu0 0.0
    %70 = vmatpush1.msra.mxu0 %v44
    %71 = vmatprep.subr.mxu0 0.0
    %72 = vmatpush1.msra.mxu0 %v45
    %73 = vmatprep.subr.mxu0 0.0
    %74 = vmatpush1.msra.mxu0 %v46
    %75 = vmatprep.subr.mxu0 0.0
    %76 = vmatpush1.msra.mxu0 %v47
    %77 = vmatprep.subr.mxu0 0.0
    %78 = vmatpush1.msra.mxu0 %v48
    %79 = vmatprep.subr.mxu0 0.0
    %80 = vmatpush1.msra.mxu0 %v49
    %81 = vmatprep.subr.mxu0 0.0
    %82 = vmatpush1.msra.mxu0 %v50
    %83 = vmatprep.subr.mxu0 0.0
    %84 = vmatpush1.msra.mxu0 %v51
    %85 = vmatprep.subr.mxu0 0.0
    %86 = vmatpush1.msra.mxu0 %v52
    %87 = vmatprep.subr.mxu0 0.0
    %88 = vmatpush1.msra.mxu0 %v53
    %89 = vmatprep.subr.mxu0 0.0
    %90 = vmatpush1.msra.mxu0 %v54
    %91 = vmatprep.subr.mxu0 0.0
    %92 = vmatpush1.msra.mxu0 %v55
    %93 = vmatprep.subr.mxu0 0.0
    %94 = vmatpush1.msra.mxu0 %v56
    %95 = vmatprep.subr.mxu0 0.0
    %96 = vmatpush1.msra.mxu0 %v57
    %97 = vmatprep.subr.mxu0 0.0
    %98 = vmatpush1.msra.mxu0 0.0
    %99 = vmatprep.subr.mxu0 0.0
    %100 = vmatpush1.msra.mxu0 0.0
    %101 = vmatprep.subr.mxu0 0.0
    %102 = vmatpush1.msra.mxu0 0.0
    %103 = vmatprep.subr.mxu0 0.0
    %104 = vmatpush1.msra.mxu0 0.0
    %105 = vmatprep.subr.mxu0 0.0
    %106 = vmatpush1.msra.mxu0 0.0
    %107 = vmatprep.subr.mxu0 0.0
    %108 = vmatpush1.msra.mxu0 0.0
    %109 = vmatprep.subr.mxu0 0.0
    %110 = vmatpush1.msra.mxu0 0.0
    %111 = vmatprep.subr.mxu0 0.0
    %112 = vmatpush1.msra.mxu0 0.0
    %113 = vmatprep.subr.mxu0 0.0
    %114 = vmatpush1.msra.mxu0 0.0
    %115 = vmatprep.subr.mxu0 0.0
    %116 = vmatpush1.msra.mxu0 0.0
    %117 = vmatprep.subr.mxu0 0.0
    %118 = vmatpush1.msra.mxu0 0.0
    %119 = vmatprep.subr.mxu0 0.0
    %120 = vmatpush1.msra.mxu0 0.0
    %121 = vmatprep.subr.mxu0 0.0
    %122 = vmatpush1.msra.mxu0 0.0
    %123 = vmatprep.subr.mxu0 0.0
    %124 = vmatpush1.msra.mxu0 0.0
    %125 = vmatprep.subr.mxu0 0.0
    %126 = vmatpush1.msra.mxu0 0.0
    %127 = vmatprep.subr.mxu0 0.0
    %128 = vmatpush1.msra.mxu0 0.0
    %129 = vmatprep.mubr.f32.mxu0 0.0
    %130 = vmatmul.mubr.f32.gmra.mrb[0].mxu0 %v41
    %v131 = vpop.f32.mrb[0].mxu0
    %v132 = vadd.f32 %v63, %v131
    %v133 = vpop.f32.mrb[0].mxu0
    %134 = vdwg.mxu0
    %135 = vst [vmem:[#allocation7] sm:$0xff] %v132
    // Predicated region
    $region22: #{tpu_custom_call.1} parent=1 // pred_check
      _
    $region23: #{tpu_custom_call.1} parent=1 // pred_check_branch
      %137 = sbr.rel (0) target = $region25
    $region24: #{tpu_custom_call.1} parent=1 // pred_region
      %s139 = ssub.s32 128, 128
      %140 = vsyncadd [#allocation4], %s139
      %s142 = sshll.u32 [#allocation7], 4
      %s143 = int_to_ptr.vmem [resolvable:$true] %s142
      %145 = dma.vmem_to_hbm [thread:$0]  %s143, 128, %s3, [#allocation4]
    $region25: #{tpu_custom_call.1} parent=1 // pred_fallthru
      _
    // Predicated region
    $region26: #{tpu_custom_call.1} parent=1 // pred_check
      _
    $region27: #{tpu_custom_call.1} parent=1 // pred_check_branch
      %147 = sbr.rel (0) target = $region29
    $region28: #{tpu_custom_call.1} parent=1 // pred_region
      %148 = dma.done [#allocation4], 128
    $region29: #{tpu_custom_call.1} parent=1 // pred_fallthru
      _
    %149 = vsyncpa [#allocation3], 1
    %150 = vsyncpa [#allocation6], 1
    %151 = vsyncpa [#allocation4], 1

</llo_original>
